<compile_context>
chip_gen: v7x
topology: tpu7x:2x2x1
jax: 0.10.0
libtpu: 0.0.40
codegen_flags: <defaults>
</compile_context>

<pallas_src>
import functools

import jax
import jax.numpy as jnp
from jax import lax
from jax.experimental import pallas as pl
from jax.experimental.pallas import tpu as pltpu


def _round_up(x, m):
    return ((x + m - 1) // m) * m


def _cdiv(a, b):
    return -(-a // b)


# ---------------------------------------------------------------------------
# Kernel bodies
# ---------------------------------------------------------------------------
def _cross_term(x_ref, t_ref, *, alpha, c_t, c_blk):
    """sum_c softmax(t*alpha)_c * log_softmax(x)_c per spatial column, (1, TS)."""
    x = (x_ref[...] if c_blk == c_t else x_ref[:c_t, :]).astype(jnp.float32)
    t = t_ref[...].astype(jnp.float32)
    if alpha != 1.0:                                   # skip the VPU mul for alpha==1
        t = t * alpha

    # log_softmax(x, dim=channel):  log_p = x_shift - lse
    x_shift = x - jnp.max(x, axis=0, keepdims=True)
    lse = jnp.log(jnp.sum(jnp.exp(x_shift), axis=0, keepdims=True))        # (1, TS)

    # Teacher softmax without materializing q:
    #   sum_c q_c*log_p_c = (sum_c t_exp_c*x_shift_c)/(sum_c t_exp_c) - lse
    t_exp = jnp.exp(t - jnp.max(t, axis=0, keepdims=True))                 # (C_t, TS)
    num = jnp.sum(t_exp * x_shift, axis=0, keepdims=True)                  # (1, TS)
    denom = jnp.sum(t_exp, axis=0, keepdims=True)                          # (1, TS)
    return num * pl.reciprocal(denom, approx=True) - lse                   # (1, TS)


def _lane_valid(tile_idx, ts, s_total):
    lane = lax.broadcasted_iota(jnp.int32, (1, ts), 1)
    return (tile_idx * ts + lane) < s_total


def _kd_kernel_none(x_ref, t_ref, o_ref, *, alpha, c_t, c_blk, ts, s_total,
                    needs_mask):
    cross = _cross_term(x_ref, t_ref, alpha=alpha, c_t=c_t, c_blk=c_blk)
    out = cross * (-1.0 / c_t)            # -(outputs * labels).mean(dim=1)
    if needs_mask:
        out = jnp.where(_lane_valid(pl.program_id(1), ts, s_total), out, 0.0)
    o_ref[...] = out


def _kd_kernel_reduce(x_ref, t_ref, o_ref, acc_ref, *, alpha, c_t, c_blk, ts,
                      s_total, nt_inner, needs_mask):
    s = pl.program_id(2)

    @pl.when(s == 0)
    def _():
        acc_ref[...] = jnp.zeros_like(acc_ref)

    cross = _cross_term(x_ref, t_ref, alpha=alpha, c_t=c_t, c_blk=c_blk)
    if needs_mask:
        tile = pl.program_id(1) * nt_inner + s          # un-clamped global tile idx
        cross = jnp.where(_lane_valid(tile, ts, s_total), cross, 0.0)
    acc_ref[...] = acc_ref[...] + cross

    @pl.when(s == nt_inner - 1)
    def _():
        # one cross-lane reduce + one lane-aligned store per (batch, chunk)
        total = jnp.sum(acc_ref[...], axis=1, keepdims=True)      # (1, 1)
        o_ref[...] = jnp.broadcast_to(total, o_ref.shape)         # (1, 128)


# ---------------------------------------------------------------------------
# Tile sizing / VMEM budgeting
# ---------------------------------------------------------------------------
def _vmem_budget_and_limit():
    """Footprint budget + scoped-VMEM limit sized per TPU generation."""
    cap = 64 * 1024 * 1024              # v7x per-TensorCore VMEM (smallest gen)
    try:
        info = pltpu.get_tpu_info()
        cap = int(getattr(info, "vmem_capacity_bytes", cap)) or cap
    except Exception:
        pass
    budget = max(8 * 2**20, min(int(cap * 0.50), cap - 16 * 2**20))
    limit = max(budget + 8 * 2**20, min(int(cap * 0.75), 96 * 2**20))
    limit = min(limit, cap - 4 * 2**20)
    return budget, limit


def _pick_spatial_tile(S, c_blk, c_t, x_isz, t_isz, reduction, budget):
    """Largest lane-aligned spatial tile whose VMEM footprint fits `budget`."""
    per_col = 2 * (c_blk * x_isz + c_t * t_isz)   # double-buffered input DMA blocks
    per_col += 4 * (6 * c_t + 8)                  # in-kernel f32 temporaries (rough)
    per_col += 8 if reduction == "none" else 4    # output block / accumulator rows
    max_ts = budget // per_col
    ts = max(128, (max_ts // 128) * 128)
    return min(ts, _round_up(S, 128))


# ---------------------------------------------------------------------------
# Public wrapper
# ---------------------------------------------------------------------------
def knowledge_distillation_loss(inputs, targets, masks=None, *,
                                alpha=1.0, reduction="mean"):
    """JAX/Pallas equivalent of KnowledgeDistillationLoss(reduction, alpha).forward.

    inputs : (B, C_in, H, W)  student logits (NCHW)
    targets: (B, C_t,  H, W)  teacher logits (NCHW), C_t <= C_in
    """
    del masks  # accepted for signature parity; the reference forward never reads it
    B, C_in, H, W = inputs.shape
    Bt, C_t, Ht, Wt = targets.shape
    assert (B, H, W) == (Bt, Ht, Wt) and C_t <= C_in
    S = H * W

    # Only DMA the student channels that are actually used (narrow(1, 0, C_t)):
    # round C_t up to the 8-sublane granule, or take the full C_in if smaller.
    C_blk = C_in if _round_up(C_t, 8) >= C_in else _round_up(C_t, 8)

    x = inputs.reshape(B, C_in, S)       # contiguous (free) reshapes
    t = targets.reshape(B, C_t, S)

    budget, vmem_limit = _vmem_budget_and_limit()
    TS = _pick_spatial_tile(S, C_blk, C_t, inputs.dtype.itemsize,
                            targets.dtype.itemsize, reduction, budget)
    NT = _cdiv(S, TS)

    # Deeper input pipelining only when VMEM pressure forces tiny tiles
    # (e.g. v5e scoped-VMEM default with many classes) and there are many.
    buffered = 3 if (TS <= 512 and NT >= 8) else None

    def _in_spec(shape, index_map):
        if buffered is not None and hasattr(pl, "Buffered"):
            try:
                return pl.BlockSpec(shape, index_map,
                                    pipeline_mode=pl.Buffered(buffered))
            except TypeError:
                pass
        return pl.BlockSpec(shape, index_map)

    common = dict(alpha=float(alpha), c_t=C_t, c_blk=C_blk, ts=TS, s_total=S)

    if reduction == "none":
        kernel = functools.partial(_kd_kernel_none,
                                   needs_mask=(S % TS != 0), **common)
        grid = (B, NT)
        in_specs = [
            _in_spec((None, C_blk, TS), lambda b, s: (b, 0, s)),
            _in_spec((None, C_t, TS), lambda b, s: (b, 0, s)),
        ]
        out_shape = jax.ShapeDtypeStruct((B, 1, S), jnp.float32)
        out_spec = pl.BlockSpec((None, 1, TS), lambda b, s: (b, 0, s))
        scratch = []
        dims = ("parallel", "parallel")
    else:
        # Split the spatial tiles into NC parallel chunks, each producing its
        # own partial sum, so both v7x TensorCores are busy even when B == 1.
        NT_inner = _cdiv(NT, min(NT, 8))
        NC = _cdiv(NT, NT_inner)
        last_tile = NT - 1
        needs_mask = (S % TS != 0) or (NC * NT_inner != NT)
        kernel = functools.partial(_kd_kernel_reduce, nt_inner=NT_inner,
                                   needs_mask=needs_mask, **common)
        grid = (B, NC, NT_inner)

        def tile_map(b, c, s):
            # Clamp so padded chunk slots re-read the last valid tile (their
            # contribution is masked to zero in-kernel).
            return (b, 0, jnp.minimum(c * NT_inner + s, last_tile))

        in_specs = [
            _in_spec((None, C_blk, TS), tile_map),
            _in_spec((None, C_t, TS), tile_map),
        ]
        # One lane-aligned 128-wide slot per (batch, chunk) partial sum.
        out_shape = jax.ShapeDtypeStruct((B, 1, NC * 128), jnp.float32)
        out_spec = pl.BlockSpec((None, 1, 128), lambda b, c, s: (b, 0, c))
        scratch = [pltpu.VMEM((1, TS), jnp.float32)]
        dims = ("parallel", "parallel", "arbitrary")

    out = pl.pallas_call(
        kernel,
        out_shape=out_shape,
        grid_spec=pltpu.PrefetchScalarGridSpec(
            num_scalar_prefetch=0,
            grid=grid,
            in_specs=in_specs,
            out_specs=out_spec,
            scratch_shapes=scratch,
        ),
        compiler_params=pltpu.CompilerParams(
            dimension_semantics=dims,
            vmem_limit_bytes=vmem_limit,
        ),
    )(x, t)

    if reduction == "none":
        return out.reshape(B, H, W)

    partials = out.reshape(B, -1, 128)[..., 0]        # (B, NC) per-chunk sums
    total = jnp.sum(partials)
    # 1/C_t (channel mean) and the pixel mean are folded into this combine.
    if reduction == "mean":
        return -total / float(C_t * B * S)
    return -total / float(C_t)


# ---------------------------------------------------------------------------
# Pure-JAX reference & self-test
# ---------------------------------------------------------------------------
def _reference(inputs, targets, *, alpha=1.0, reduction="mean"):
    """Pure-JAX reference mirroring the PyTorch module (kd_cil_weights=False)."""
    C_t = targets.shape[1]
    x = inputs[:, :C_t]
    log_p = jax.nn.log_softmax(x.astype(jnp.float32), axis=1)
    q = jax.nn.softmax(targets.astype(jnp.float32) * alpha, axis=1)
    loss = jnp.mean(log_p * q, axis=1)
    if reduction == "mean":
        return -jnp.mean(loss)
    elif reduction == "sum":
        return -jnp.sum(loss)
    return -loss


if __name__ == "__main__":
    key = jax.random.PRNGKey(0)
    k1, k2 = jax.random.split(key)

    B, C_in, C_t, H, W = 2, 6, 4, 16, 16
    inputs = jax.random.normal(k1, (B, C_in, H, W), dtype=jnp.float32)
    targets = jax.random.normal(k2, (B, C_t, H, W), dtype=jnp.float32)

    cases = [("mean", 1.0), ("sum", 1.0), ("none", 1.0), ("mean", 0.5)]
    for reduction, alpha in cases:
        out = knowledge_distillation_loss(inputs, targets,
                                          alpha=alpha, reduction=reduction)
        out = jax.block_until_ready(out)
        ref = _reference(inputs, targets, alpha=alpha, reduction=reduction)
        assert out.shape == ref.shape, (reduction, out.shape, ref.shape)
        # Tolerance leaves headroom for the EUP approximate reciprocal used
        # for the teacher-softmax denominator.
        assert jnp.allclose(out, ref, rtol=5e-3, atol=5e-4), (reduction, out, ref)

    print("KERNEL_OK")
</pallas_src>

<mosaic_0001>
module attributes {stable_mosaic.version = 11 : i64} {
  func.func @_kd_kernel_reduce(%arg0: i32, %arg1: i32, %arg2: i32, %arg3: memref<1x6x256xf32, #tpu.memory_space<vmem>>, %arg4: memref<1x4x256xf32, #tpu.memory_space<vmem>>, %arg5: memref<1x1x128xf32, #tpu.memory_space<vmem>>, %arg6: memref<1x256xf32, #tpu.memory_space<vmem>>) attributes {dimension_semantics = [#tpu.dimension_semantics<parallel>, #tpu.dimension_semantics<parallel>, #tpu.dimension_semantics<arbitrary>], iteration_bounds = array<i64: 2, 1, 1>, scalar_prefetch = 0 : i64, scratch_operands = 1 : i64, tpu.core_type = #tpu.core_type<tc>, window_params = [{transform_indices = @transform_0, window_bounds = array<i64: 1, 6, 256>}, {transform_indices = @transform_1, window_bounds = array<i64: 1, 4, 256>}, {transform_indices = @transform_2, window_bounds = array<i64: 1, 1, 128>}]} {
    %c0_i32 = arith.constant 0 : i32
    %0 = arith.cmpi eq, %arg2, %c0_i32 : i32
    %1 = arith.extui %0 : i1 to i32
    %c0_i32_0 = arith.constant 0 : i32
    %2 = arith.cmpi ne, %1, %c0_i32_0 : i32
    scf.if %2 {
      %cst_16 = arith.constant 0.000000e+00 : f32
      %34 = vector.broadcast %cst_16 : f32 to vector<1x256xf32>
      %c0_17 = arith.constant 0 : index
      %c0_18 = arith.constant 0 : index
      %35 = vector.load %arg6[%c0_17, %c0_18] : memref<1x256xf32, #tpu.memory_space<vmem>>, vector<1x256xf32>
      tpu.vector_store %arg6[%c0_17, %c0_18], %34 {strides = array<i32>} : memref<1x256xf32, #tpu.memory_space<vmem>>, vector<1x256xf32>,
    } else {
    }
    %c0 = arith.constant 0 : index
    %c0_1 = arith.constant 0 : index
    %c0_2 = arith.constant 0 : index
    %3 = vector.load %arg3[%c0, %c0_1, %c0_2] : memref<1x6x256xf32, #tpu.memory_space<vmem>>, vector<1x4x256xf32>
    %4 = vector.shape_cast %3 : vector<1x4x256xf32> to vector<4x256xf32>
    %c0_3 = arith.constant 0 : index
    %c0_4 = arith.constant 0 : index
    %c0_5 = arith.constant 0 : index
    %5 = vector.load %arg4[%c0_3, %c0_4, %c0_5] : memref<1x4x256xf32, #tpu.memory_space<vmem>>, vector<1x4x256xf32>
    %6 = vector.shape_cast %5 : vector<1x4x256xf32> to vector<4x256xf32>
    %cst = arith.constant dense<0xFF800000> : vector<256xf32>
    %7 = vector.multi_reduction <maximumf>, %4, %cst [0] : vector<4x256xf32> to vector<256xf32>
    %8 = vector.shape_cast %7 : vector<256xf32> to vector<1x256xf32>
    %9 = vector.broadcast %8 : vector<1x256xf32> to vector<4x256xf32>
    %10 = arith.subf %4, %9 : vector<4x256xf32>
    %11 = math.exp %10 : vector<4x256xf32>
    %cst_6 = arith.constant dense<0.000000e+00> : vector<256xf32>
    %12 = vector.multi_reduction <add>, %11, %cst_6 [0] : vector<4x256xf32> to vector<256xf32>
    %13 = vector.shape_cast %12 : vector<256xf32> to vector<1x256xf32>
    %14 = math.log %13 : vector<1x256xf32>
    %cst_7 = arith.constant dense<0xFF800000> : vector<256xf32>
    %15 = vector.multi_reduction <maximumf>, %6, %cst_7 [0] : vector<4x256xf32> to vector<256xf32>
    %16 = vector.shape_cast %15 : vector<256xf32> to vector<1x256xf32>
    %17 = vector.broadcast %16 : vector<1x256xf32> to vector<4x256xf32>
    %18 = arith.subf %6, %17 : vector<4x256xf32>
    %19 = math.exp %18 : vector<4x256xf32>
    %20 = arith.mulf %19, %10 : vector<4x256xf32>
    %cst_8 = arith.constant dense<0.000000e+00> : vector<256xf32>
    %21 = vector.multi_reduction <add>, %20, %cst_8 [0] : vector<4x256xf32> to vector<256xf32>
    %22 = vector.shape_cast %21 : vector<256xf32> to vector<1x256xf32>
    %cst_9 = arith.constant dense<0.000000e+00> : vector<256xf32>
    %23 = vector.multi_reduction <add>, %19, %cst_9 [0] : vector<4x256xf32> to vector<256xf32>
    %24 = vector.shape_cast %23 : vector<256xf32> to vector<1x256xf32>
    %25 = tpu.reciprocal %24 {approx = true} : vector<1x256xf32> -> vector<1x256xf32>
    %26 = arith.mulf %22, %25 : vector<1x256xf32>
    %27 = arith.subf %26, %14 : vector<1x256xf32>
    %c0_10 = arith.constant 0 : index
    %c0_11 = arith.constant 0 : index
    %28 = vector.load %arg6[%c0_10, %c0_11] : memref<1x256xf32, #tpu.memory_space<vmem>>, vector<1x256xf32>
    %29 = arith.addf %28, %27 : vector<1x256xf32>
    %c0_12 = arith.constant 0 : index
    %c0_13 = arith.constant 0 : index
    %30 = vector.load %arg6[%c0_12, %c0_13] : memref<1x256xf32, #tpu.memory_space<vmem>>, vector<1x256xf32>
    tpu.vector_store %arg6[%c0_12, %c0_13], %29 {strides = array<i32>} : memref<1x256xf32, #tpu.memory_space<vmem>>, vector<1x256xf32>,
    %c0_i32_14 = arith.constant 0 : i32
    %31 = arith.cmpi eq, %arg2, %c0_i32_14 : i32
    %32 = arith.extui %31 : i1 to i32
    %c0_i32_15 = arith.constant 0 : i32
    %33 = arith.cmpi ne, %32, %c0_i32_15 : i32
    scf.if %33 {
      %c0_16 = arith.constant 0 : index
      %c0_17 = arith.constant 0 : index
      %34 = vector.load %arg6[%c0_16, %c0_17] : memref<1x256xf32, #tpu.memory_space<vmem>>, vector<1x256xf32>
      %cst_18 = arith.constant dense<0.000000e+00> : vector<1xf32>
      %35 = vector.multi_reduction <add>, %34, %cst_18 [1] : vector<1x256xf32> to vector<1xf32>
      %36 = vector.shape_cast %35 : vector<1xf32> to vector<1x1xf32>
      %37 = vector.shape_cast %36 : vector<1x1xf32> to vector<1x1xf32>
      %38 = vector.broadcast %37 : vector<1x1xf32> to vector<1x128xf32>
      %c0_19 = arith.constant 0 : index
      %c0_20 = arith.constant 0 : index
      %c0_21 = arith.constant 0 : index
      %39 = vector.load %arg5[%c0_19, %c0_20, %c0_21] : memref<1x1x128xf32, #tpu.memory_space<vmem>>, vector<1x1x128xf32>
      %40 = vector.shape_cast %39 : vector<1x1x128xf32> to vector<1x128xf32>
      %41 = vector.shape_cast %38 : vector<1x128xf32> to vector<1x1x128xf32>
      tpu.vector_store %arg5[%c0_19, %c0_20, %c0_21], %41 {strides = array<i32>} : memref<1x1x128xf32, #tpu.memory_space<vmem>>, vector<1x1x128xf32>,
    } else {
    }
    return
  }
  func.func @transform_0(%arg0: i32, %arg1: i32, %arg2: i32) -> (i32, i32, i32) {
    %c1_i32 = arith.constant 1 : i32
    %0 = arith.muli %arg1, %c1_i32 : i32
    %1 = arith.addi %0, %arg2 : i32
    %c0_i32 = arith.constant 0 : i32
    %2 = arith.minsi %1, %c0_i32 : i32
    %c0_i32_0 = arith.constant 0 : i32
    %c0_i32_1 = arith.constant 0 : i32
    return %arg0, %c0_i32_0, %2 : i32, i32, i32
  }
  func.func @transform_1(%arg0: i32, %arg1: i32, %arg2: i32) -> (i32, i32, i32) {
    %c1_i32 = arith.constant 1 : i32
    %0 = arith.muli %arg1, %c1_i32 : i32
    %1 = arith.addi %0, %arg2 : i32
    %c0_i32 = arith.constant 0 : i32
    %2 = arith.minsi %1, %c0_i32 : i32
    %c0_i32_0 = arith.constant 0 : i32
    %c0_i32_1 = arith.constant 0 : i32
    return %arg0, %c0_i32_0, %2 : i32, i32, i32
  }
  func.func @transform_2(%arg0: i32, %arg1: i32, %arg2: i32) -> (i32, i32, i32) {
    %c0_i32 = arith.constant 0 : i32
    %c0_i32_0 = arith.constant 0 : i32
    return %arg0, %c0_i32, %arg1 : i32, i32, i32
  }
}

</mosaic_0001>

<llo_original>
// kernel: tpu_custom_call.1
$region0: #{tpu_custom_call.1}
  #allocation0 [shape = 'u32[]', space=smem, size = 0x4, offset = 0x4, fixed_abs, tag = 'smem constant byte address 0x4 - core index']
  #allocation1 [shape = 'u32[144,128]{1,0:T(1,128)}', space=vmem, size = 0x12000, scoped, tag = 'internal scratch']
  #allocation2 [shape = 'f32[1,256]{1,0:T(1,128)}', space=vmem, size = 0x400, scoped, tag = 'scratch operand']
  %s0 = inlined_call_operand.vmem [shape: f32[2,6,256], index: 0, kind: input, shape index: {}]
  %s1 = inlined_call_operand.vmem [shape: f32[2,4,256], index: 1, kind: input, shape index: {}]
  %s2 = inlined_call_operand.hbm [shape: f32[2,1,128], index: 2, kind: output, shape index: {}]
  %s3 = sld [smem:[#allocation0]]
  $region49: #{tpu_custom_call.1} parent=0
    _
  %s5 = ssub.s32 1, %s3
  %s6 = scalar_select 0, %s5, %s3
  $region1: #{tpu_custom_call.1} parent=0
    #allocation3 [shape = 'u8[1024]{0}', space=vmem, size = 0x400, scoped, tag = 'output window, operand 0']
    #allocation4 [shape = 's32[2]{0}', space=sflag, size = 0x8, scoped, tag = 'scoped memory for tpu_custom_call.1']
    %7 = vsyncpa [#allocation4], 0
    %s8 = scalar_lea.sflag [#allocation4], 1
    %9 = vsyncpa %s8, 0
    loop: start=0, step=1, limit=4
    $region2: #{tpu_custom_call.1} parent=1 // loop_pre_header
      _
    $region3: #{tpu_custom_call.1} parent=1 // loop_header
      %s11 = sphi 0, %s15
      %p12 = scmp.ge.s32.totalorder %s11, 4
      %s18 = sphi 0, %s37
      %s19 = sphi 0, %s33
      %s20 = sphi 0, %s29
      %s21 = sphi 0, %s18
      %s22 = sphi 0, %s19
      %s23 = sphi 0, %s20
      %s24 = sphi 0, %s21
      %s25 = sphi 0, %s22
      %s26 = sphi 0, %s23
      %s48 = sphi 0, %s50
      %s51 = sphi 0, %s48
      %s52 = sphi 0, %s51
      %s68 = sphi 0, %s52
      %s82 = sphi 0, %s84
      %s85 = sphi 0, %s82
      %s86 = sphi 0, %s85
      %s102 = sphi 0, %s86
      %s110 = sphi 0, %s112
      %s113 = sphi 0, %s110
      %s114 = sphi 0, %s113
      %s130 = sphi 0, %s114
    $region4: #{tpu_custom_call.1} parent=1 // loop_header_branch
      %14 = sbr.rel (%p12) target = $region8
    $region5: #{tpu_custom_call.1} parent=1 // loop_body
      %s16 = ssub.s32 %s11, 1
      %s17 = ssub.s32 %s11, 2
      %s27 = sadd.s32 1, %s20
      %p28 = scmp.ge.s32.totalorder %s27, 1
      %s29 = scalar_select %p28, 0, %s27
      %s30 = sadd.s32 1, %s19
      %s31 = scalar_select %p28, %s30, %s19
      %p32 = scmp.ge.s32.totalorder %s31, 1
      %s33 = scalar_select %p32, 0, %s31
      %s34 = sadd.s32 1, %s18
      %s35 = scalar_select %p32, %s34, %s18
      %p36 = scmp.ge.s32.totalorder %s35, 2
      %s37 = scalar_select %p36, 0, %s35
      %s38 = sadd.s32 %s19, %s20
      %p39 = scmp.lt.s32.totalorder %s38, 0
      %s40 = scalar_select %p39, %s38, 0
      %s41 = sadd.s32 %s33, %s29
      %p42 = scmp.lt.s32.totalorder %s41, 0
      %s43 = scalar_select %p42, %s41, 0
      %s44 = ssub.s32 %s18, %s37
      %s45 = ssub.s32 %s40, %s43
      %s46 = sor.u32 %s44, %s45
      %p47 = scmp.eq.s32.totalorder %s46, 0
      %s49 = sadd.s32 %s48, 1
      %s50 = scalar_select %p47, %s48, %s49
      %p53 = pneg %p47
      %p54 = scmp.eq.s32.totalorder %s11, 1
      %p55 = por %p53, %p54
      %p56 = scmp.ne.s32.totalorder %s48, %s51
      %p57 = scmp.eq.s32.totalorder %s11, 0
      %p58 = por %p56, %p57
      %p59 = scmp.ne.s32.totalorder %s48, %s51
      %p60 = scmp.eq.s32.totalorder %s16, 1
      %p61 = por %p59, %p60
      %p62 = scmp.ne.s32.totalorder %s51, %s52
      %p63 = scmp.eq.s32.totalorder %s16, 0
      %p64 = por %p62, %p63
      %p65 = scmp.ne.s32.totalorder %s51, %s52
      %p66 = scmp.eq.s32.totalorder %s17, 1
      %p67 = por %p65, %p66
      %p69 = scmp.ne.s32.totalorder %s52, %s68
      %p70 = scmp.eq.s32.totalorder %s17, 0
      %p71 = por %p69, %p70
      %s72 = sadd.s32 %s19, %s20
      %p73 = scmp.lt.s32.totalorder %s72, 0
      %s74 = scalar_select %p73, %s72, 0
      %s75 = sadd.s32 %s33, %s29
      %p76 = scmp.lt.s32.totalorder %s75, 0
      %s77 = scalar_select %p76, %s75, 0
      %s78 = ssub.s32 %s18, %s37
      %s79 = ssub.s32 %s74, %s77
      %s80 = sor.u32 %s78, %s79
      %p81 = scmp.eq.s32.totalorder %s80, 0
      %s83 = sadd.s32 %s82, 1
      %s84 = scalar_select %p81, %s82, %s83
      %p87 = pneg %p81
      %p88 = scmp.eq.s32.totalorder %s11, 1
      %p89 = por %p87, %p88
      %p90 = scmp.ne.s32.totalorder %s82, %s85
      %p91 = scmp.eq.s32.totalorder %s11, 0
      %p92 = por %p90, %p91
      %p93 = scmp.ne.s32.totalorder %s82, %s85
      %p94 = scmp.eq.s32.totalorder %s16, 1
      %p95 = por %p93, %p94
      %p96 = scmp.ne.s32.totalorder %s85, %s86
      %p97 = scmp.eq.s32.totalorder %s16, 0
      %p98 = por %p96, %p97
      %p99 = scmp.ne.s32.totalorder %s85, %s86
      %p100 = scmp.eq.s32.totalorder %s17, 1
      %p101 = por %p99, %p100
      %p103 = scmp.ne.s32.totalorder %s86, %s102
      %p104 = scmp.eq.s32.totalorder %s17, 0
      %p105 = por %p103, %p104
      %s106 = ssub.s32 %s18, %s37
      %s107 = ssub.s32 %s19, %s33
      %s108 = sor.u32 %s106, %s107
      %p109 = scmp.eq.s32.totalorder %s108, 0
      %s111 = sadd.s32 %s110, 1
      %s112 = scalar_select %p109, %s110, %s111
      %p115 = pneg %p109
      %p116 = scmp.eq.s32.totalorder %s11, 1
      %p117 = por %p115, %p116
      %p118 = scmp.ne.s32.totalorder %s110, %s113
      %p119 = scmp.eq.s32.totalorder %s11, 0
      %p120 = por %p118, %p119
      %p121 = scmp.ne.s32.totalorder %s110, %s113
      %p122 = scmp.eq.s32.totalorder %s16, 1
      %p123 = por %p121, %p122
      %p124 = scmp.ne.s32.totalorder %s113, %s114
      %p125 = scmp.eq.s32.totalorder %s16, 0
      %p126 = por %p124, %p125
      %p127 = scmp.ne.s32.totalorder %s113, %s114
      %p128 = scmp.eq.s32.totalorder %s17, 1
      %p129 = por %p127, %p128
      %p131 = scmp.ne.s32.totalorder %s114, %s130
      %p132 = scmp.eq.s32.totalorder %s17, 0
      %p133 = por %p131, %p132
      %p134 = scmp.le.s32.totalorder 1, %s11
      %p135 = scmp.lt.s32.totalorder %s11, 3
      %p136 = pnand %p134, %p135
      %p137 = pneg %p136
      // Predicated region
      $region9: #{tpu_custom_call.1} parent=5 // pred_check
        _
      $region10: #{tpu_custom_call.1} parent=5 // pred_check_branch
        %139 = sbr.rel (%p136) target = $region12
      $region11: #{tpu_custom_call.1} parent=5 // pred_region
        %s140 = ssub.s32 %s11, 1
      $region12: #{tpu_custom_call.1} parent=5 // pred_fallthru
        _
      %p141 = scmp.lt.s32.totalorder %s11, 2
      // Predicated region
      $region13: #{tpu_custom_call.1} parent=5 // pred_check
        %p142 = pneg %p141
      $region14: #{tpu_custom_call.1} parent=5 // pred_check_branch
        %144 = sbr.rel (%p142) target = $region16
      $region15: #{tpu_custom_call.1} parent=5 // pred_region
        // Predicated region
        $region17: #{tpu_custom_call.1} parent=15 // pred_check
          %p145 = pneg %p58
        $region18: #{tpu_custom_call.1} parent=15 // pred_check_branch
          %147 = sbr.rel (%p145) target = $region20
        $region19: #{tpu_custom_call.1} parent=15 // pred_region
          %s148 = sadd.s32 %s19, %s20
          %p149 = scmp.lt.s32.totalorder %s148, 0
          %s150 = scalar_select %p149, %s148, 0
          %s151 = smul.u32 2, %s150
          %p152 = scmp.lt.s32.totalorder %s18, 1
          %s153 = scalar_select %p152, %s18, 1
          %p154 = scmp.lt.s32.totalorder %s151, 1
          %s155 = scalar_select %p154, %s151, 1
          %s156 = smul.addr %s153, 2
          %s157 = sadd.s32 %s155, %s156
          %s158 = smul.addr %s157, 8
          %s159 = scalar_lea.vmem %s0, %s158
          %s160 = sadd.s32 %s19, %s20
          %p161 = scmp.lt.s32.totalorder %s160, 0
          %s162 = scalar_select %p161, %s160, 0
          %s163 = smul.u32 2, %s162
        $region20: #{tpu_custom_call.1} parent=15 // pred_fallthru
          _
        // Predicated region
        $region21: #{tpu_custom_call.1} parent=15 // pred_check
          %p164 = pneg %p92
        $region22: #{tpu_custom_call.1} parent=15 // pred_check_branch
          %166 = sbr.rel (%p164) target = $region24
        $region23: #{tpu_custom_call.1} parent=15 // pred_region
          %s167 = sadd.s32 %s19, %s20
          %p168 = scmp.lt.s32.totalorder %s167, 0
          %s169 = scalar_select %p168, %s167, 0
          %s170 = smul.u32 2, %s169
          %p171 = scmp.lt.s32.totalorder %s18, 1
          %s172 = scalar_select %p171, %s18, 1
          %p173 = scmp.lt.s32.totalorder %s170, 1
          %s174 = scalar_select %p173, %s170, 1
          %s175 = smul.addr %s172, 2
          %s176 = sadd.s32 %s174, %s175
          %s177 = smul.addr %s176, 4
          %s178 = scalar_lea.vmem %s1, %s177
          %s179 = sadd.s32 %s19, %s20
          %p180 = scmp.lt.s32.totalorder %s179, 0
          %s181 = scalar_select %p180, %s179, 0
          %s182 = smul.u32 2, %s181
        $region24: #{tpu_custom_call.1} parent=15 // pred_fallthru
          _
      $region16: #{tpu_custom_call.1} parent=5 // pred_fallthru
        _
      %p183 = scmp.le.s32.totalorder 1, %s11
      %p184 = scmp.lt.s32.totalorder %s11, 3
      %p185 = pnand %p183, %p184
      %p186 = pneg %p185
      // Predicated region
      $region25: #{tpu_custom_call.1} parent=5 // pred_check
        _
      $region26: #{tpu_custom_call.1} parent=5 // pred_check_branch
        %188 = sbr.rel (%p185) target = $region28
      $region27: #{tpu_custom_call.1} parent=5 // pred_region
        %s189 = ssub.s32 %s11, 1
        %s190 = sadd.s32 %s22, %s23
        %p191 = scmp.lt.s32.totalorder %s190, 0
        %s192 = scalar_select %p191, %s190, 0
        %s193 = smul.u32 2, %s192
        %p194 = scmp.lt.s32.totalorder %s21, 1
        %s195 = scalar_select %p194, %s21, 1
        %p196 = scmp.lt.s32.totalorder %s193, 1
        %s197 = scalar_select %p196, %s193, 1
        %s198 = smul.addr %s195, 2
        %s199 = sadd.s32 %s197, %s198
        %s200 = smul.addr %s199, 8
        %s201 = scalar_lea.vmem %s0, %s200
        %p202 = pneg %p64
        %p203 = pneg %p61
        %s204 = sadd.s32 %s22, %s23
        %p205 = scmp.lt.s32.totalorder %s204, 0
        %s206 = scalar_select %p205, %s204, 0
        %s207 = smul.u32 2, %s206
        %p208 = scmp.lt.s32.totalorder %s21, 1
        %s209 = scalar_select %p208, %s21, 1
        %p210 = scmp.lt.s32.totalorder %s207, 1
        %s211 = scalar_select %p210, %s207, 1
        %s212 = smul.addr %s209, 2
        %s213 = sadd.s32 %s211, %s212
        %s214 = smul.addr %s213, 4
        %s215 = scalar_lea.vmem %s1, %s214
        %p216 = pneg %p98
        %p217 = pneg %p95
        %p218 = pneg %p126
        %p219 = pneg %p123
        %s220 = sand.u32 %s113, 1
        %s221 = scalar_lea.sflag [#allocation4], %s220
        %s222 = sand.u32 %s113, 1
        %s223 = scalar_lea.vmem [#allocation3], %s222
        %s224 = sadd.s32 %s22, %s23
        %p225 = scmp.lt.s32.totalorder %s224, 0
        %s226 = scalar_select %p225, %s224, 0
        %s227 = smul.u32 2, %s226
        %p228 = scmp.lt.s32.totalorder %s21, 1
        %s229 = scalar_select %p228, %s21, 1
        %p230 = scmp.lt.s32.totalorder %s227, 1
        %s231 = scalar_select %p230, %s227, 1
        %s232 = smul.addr %s229, 2
        %s233 = sadd.s32 %s231, %s232
        %s234 = smul.addr %s233, 8
        %s235 = scalar_lea.vmem %s0, %s234
        %s236 = sadd.s32 %s22, %s23
        %p237 = scmp.lt.s32.totalorder %s236, 0
        %s238 = scalar_select %p237, %s236, 0
        %s239 = smul.u32 2, %s238
        %s240 = sadd.s32 %s22, %s23
        %p241 = scmp.lt.s32.totalorder %s240, 0
        %s242 = scalar_select %p241, %s240, 0
        %s243 = smul.u32 2, %s242
        %p244 = scmp.lt.s32.totalorder %s21, 1
        %s245 = scalar_select %p244, %s21, 1
        %p246 = scmp.lt.s32.totalorder %s243, 1
        %s247 = scalar_select %p246, %s243, 1
        %s248 = smul.addr %s245, 2
        %s249 = sadd.s32 %s247, %s248
        %s250 = smul.addr %s249, 4
        %s251 = scalar_lea.vmem %s1, %s250
        %s252 = sadd.s32 %s22, %s23
        %p253 = scmp.lt.s32.totalorder %s252, 0
        %s254 = scalar_select %p253, %s252, 0
        %s255 = smul.u32 2, %s254
        %p256 = scmp.eq.s32.totalorder %s23, 0
        // Predicated region
        $region29: #{tpu_custom_call.1} parent=27 // pred_check
          %p257 = pneg %p256
        $region30: #{tpu_custom_call.1} parent=27 // pred_check_branch
          %259 = sbr.rel (%p257) target = $region32
        $region31: #{tpu_custom_call.1} parent=27 // pred_region
          %v260 = vlaneseq
          %vm261 = vcmp.ge.s32.totalorder %v260, 0
          %vm262 = vcmp.lt.s32.totalorder %v260, 256
          %vm263 = vmand %vm261, %vm262
          %264 = vst.msk [vmem:[#allocation2] sm:$0x3] %vm263, 0.0
        $region32: #{tpu_custom_call.1} parent=27 // pred_fallthru
          _
        %v265 = vld [vmem:[%s235] sm:$0xf]
        %v266 = vld [vmem:[%s235 + $0x8] sm:$0xf]
        %v267 = vld [vmem:[%s251] sm:$0xff]
        %vm268 = vcmask 1043456
        %v269 = vsel %vm268, %v265, -inf
        %v270 = vrot.slane %v269, 4
        %v271 = vmax.f32 %v269, %v270
        %v272 = vrot.slane %v271, 2
        %v273 = vmax.f32 %v271, %v272
        %v274 = vrot.slane %v273, 1
        %v275 = vmax.f32 %v273, %v274
        %v276 = vsel %vm268, %v266, -inf
        %v277 = vrot.slane %v276, 4
        %v278 = vmax.f32 %v276, %v277
        %v279 = vrot.slane %v278, 2
        %v280 = vmax.f32 %v278, %v279
        %v281 = vrot.slane %v280, 1
        %v282 = vmax.f32 %v280, %v281
        %v283 = vsub.f32 %v265, %v275
        %v284 = vsub.f32 %v266, %v282
        %v285 = vmul.f32 %v283, 1.442695
        %v286 = vpow.pop %v285
        %v287 = vmul.f32 %v284, 1.442695
        %v288 = vpow.pop %v287
        %v289 = vsel %vm268, %v286, 0.0
        %v290 = vrot.slane %v289, 4
        %v291 = vadd.f32 %v289, %v290
        %v292 = vrot.slane %v291, 2
        %v293 = vadd.f32 %v291, %v292
        %v294 = vrot.slane %v293, 1
        %v295 = vadd.f32 %v293, %v294
        %v296 = vsel %vm268, %v288, 0.0
        %v297 = vrot.slane %v296, 4
        %v298 = vadd.f32 %v296, %v297
        %v299 = vrot.slane %v298, 2
        %v300 = vadd.f32 %v298, %v299
        %v301 = vrot.slane %v300, 1
        %v302 = vadd.f32 %v300, %v301
        %v303 = vlog2.pop %v295
        %v304 = vmul.f32 %v303, 0.6931472
        %v305 = vlog2.pop %v302
        %v306 = vmul.f32 %v305, 0.6931472
        %v308 = vcombine.high %v267, %v267
        %v310 = vsel %vm268, %v267, -inf
        %v311 = vrot.slane %v310, 4
        %v312 = vmax.f32 %v310, %v311
        %v313 = vrot.slane %v312, 2
        %v314 = vmax.f32 %v312, %v313
        %v315 = vrot.slane %v314, 1
        %v316 = vmax.f32 %v314, %v315
        %v317 = vsel %vm268, %v308, -inf
        %v318 = vrot.slane %v317, 4
        %v319 = vmax.f32 %v317, %v318
        %v320 = vrot.slane %v319, 2
        %v321 = vmax.f32 %v319, %v320
        %v322 = vrot.slane %v321, 1
        %v323 = vmax.f32 %v321, %v322
        %v326 = vcombine.low %v316, %v323
        %v328 = vsub.f32 %v267, %v326
        %v329 = vmul.f32 %v328, 1.442695
        %v330 = vpow.pop %v329
        %v333 = vcombine.low %v283, %v284
        %v335 = vmul.f32 %v330, %v333
        %v337 = vcombine.high %v335, %v335
        %v339 = vsel %vm268, %v335, 0.0
        %v340 = vrot.slane %v339, 4
        %v341 = vadd.f32 %v339, %v340
        %v342 = vrot.slane %v341, 2
        %v343 = vadd.f32 %v341, %v342
        %v344 = vrot.slane %v343, 1
        %v345 = vadd.f32 %v343, %v344
        %v346 = vsel %vm268, %v337, 0.0
        %v347 = vrot.slane %v346, 4
        %v348 = vadd.f32 %v346, %v347
        %v349 = vrot.slane %v348, 2
        %v350 = vadd.f32 %v348, %v349
        %v351 = vrot.slane %v350, 1
        %v352 = vadd.f32 %v350, %v351
        %v354 = vcombine.high %v330, %v330
        %v356 = vsel %vm268, %v330, 0.0
        %v357 = vrot.slane %v356, 4
        %v358 = vadd.f32 %v356, %v357
        %v359 = vrot.slane %v358, 2
        %v360 = vadd.f32 %v358, %v359
        %v361 = vrot.slane %v360, 1
        %v362 = vadd.f32 %v360, %v361
        %v363 = vsel %vm268, %v354, 0.0
        %v364 = vrot.slane %v363, 4
        %v365 = vadd.f32 %v363, %v364
        %v366 = vrot.slane %v365, 2
        %v367 = vadd.f32 %v365, %v366
        %v368 = vrot.slane %v367, 1
        %v369 = vadd.f32 %v367, %v368
        %v370 = vrcp.pop %v362
        %v371 = vrcp.pop %v369
        %v372 = vmul.f32 %v345, %v370
        %v373 = vmul.f32 %v352, %v371
        %v374 = vsub.f32 %v372, %v304
        %v375 = vsub.f32 %v373, %v306
        %v376 = vld [vmem:[#allocation2] sm:$0x3]
        %v379 = vcombine.low %v374, %v375
        %v381 = vunpack.c.l.s4 1966171168
        %v382 = vunpack.c.0.s8 %v381
        %v383 = vlaneseq
        %v384 = vshrl.u32 %v383, 7
        %v385 = vsub.s32 %v382, %v384
        %v386 = vrot.slane %v379, %v385
        %v388 = vunpack.c.l.s4 1966171168
        %v389 = vunpack.c.0.s8 %v388
        %v390 = vlaneseq
        %v391 = vshrl.u32 %v390, 7
        %v392 = vsub.s32 %v389, %v391
        %v393 = vrot.slane %v386, %v392
        %v395 = vadd.f32 %v376, %v393
        %v396 = vlaneseq
        %vm397 = vcmp.ge.s32.totalorder %v396, 0
        %vm398 = vcmp.lt.s32.totalorder %v396, 256
        %vm399 = vmand %vm397, %vm398
        %400 = vst.msk [vmem:[#allocation2] sm:$0x3] %vm399, %v395
        // Predicated region
        $region33: #{tpu_custom_call.1} parent=27 // pred_check
          %p401 = pneg %p256
        $region34: #{tpu_custom_call.1} parent=27 // pred_check_branch
          %403 = sbr.rel (%p401) target = $region36
        $region35: #{tpu_custom_call.1} parent=27 // pred_region
          %v404 = vld [vmem:[#allocation2] sm:$0x3]
          %v406 = vlaneseq
          %v407 = vshrl.u32 %v406, 7
          %v408 = vsub.s32 0, %v407
          %v409 = vrot.slane %v404, %v408
          %v410 = vlaneseq
          %v411 = vshrl.u32 %v410, 7
          %v412 = vsub.s32 1, %v411
          %v413 = vrot.slane %v404, %v412
          %vm416 = vcmask 1040384
          %v417 = vsel %vm416, %v409, 0.0
          %v418 = vsel %vm416, %v413, 0.0
          %v419 = vadd.f32 %v417, %v418
          %420 = vadd.xlane.f32.xlu0 %v419
          %v421 = vpop.xlane.xlu0 %420
          %422 = vst [vmem:[%s223] sm:$0x1] %v421
        $region36: #{tpu_custom_call.1} parent=27 // pred_fallthru
          _
        %s423 = sand.u32 %s113, 1
        %s424 = scalar_lea.sflag [#allocation4], %s423
        %s425 = sand.u32 %s113, 1
        %s426 = scalar_lea.vmem [#allocation3], %s425
        // Predicated region
        $region37: #{tpu_custom_call.1} parent=27 // pred_check
          %p427 = pneg %p123
        $region38: #{tpu_custom_call.1} parent=27 // pred_check_branch
          %429 = sbr.rel (%p427) target = $region40
        $region39: #{tpu_custom_call.1} parent=27 // pred_region
          %s431 = ssub.s32 16, 16
          %432 = vsyncadd %s424, %s431
          %s433 = sadd.s32 %s22, %s21
          %s434 = smul.addr %s433, 16
          %s435 = scalar_lea.hbm %s2, %s434
          %s437 = sshll.u32 %s426, 4
          %s438 = int_to_ptr.vmem [resolvable:$true] %s437
          %440 = dma.vmem_to_hbm [thread:$0]  %s438, 16, %s435, %s424
        $region40: #{tpu_custom_call.1} parent=27 // pred_fallthru
          _
      $region28: #{tpu_custom_call.1} parent=5 // pred_fallthru
        _
      %p441 = scmp.le.s32.totalorder 2, %s11
      // Predicated region
      $region41: #{tpu_custom_call.1} parent=5 // pred_check
        %p442 = pneg %p441
      $region42: #{tpu_custom_call.1} parent=5 // pred_check_branch
        %444 = sbr.rel (%p442) target = $region44
      $region43: #{tpu_custom_call.1} parent=5 // pred_region
        %s445 = ssub.s32 %s11, 2
        // Predicated region
        $region45: #{tpu_custom_call.1} parent=43 // pred_check
          %p446 = pneg %p129
        $region46: #{tpu_custom_call.1} parent=43 // pred_check_branch
          %448 = sbr.rel (%p446) target = $region48
        $region47: #{tpu_custom_call.1} parent=43 // pred_region
          %s449 = sand.u32 %s114, 1
          %s450 = scalar_lea.sflag [#allocation4], %s449
          %s451 = sand.u32 %s114, 1
          %s452 = scalar_lea.vmem [#allocation3], %s451
          %453 = dma.done %s450, 16
        $region48: #{tpu_custom_call.1} parent=43 // pred_fallthru
          _
      $region44: #{tpu_custom_call.1} parent=5 // pred_fallthru
        _
    $region6: #{tpu_custom_call.1} parent=1 // loop_footer
      %s15 = sadd.s32 1, %s11
    $region7: #{tpu_custom_call.1} parent=1 // loop_footer_branch
      %10 = sbr.rel target = $region3
    $region8: #{tpu_custom_call.1} parent=1 // loop_exit
      _
    %454 = vsyncpa [#allocation4], 1
    %s455 = scalar_lea.sflag [#allocation4], 1
    %456 = vsyncpa %s455, 1

</llo_original>
